<compile_context>
chip_gen: v7x
topology: tpu7x:2x2x1
jax: 0.10.0
libtpu: 0.0.40
codegen_flags: <defaults>
</compile_context>

<pallas_src>
import functools

import jax
import jax.numpy as jnp
from jax.experimental import pallas as pl
from jax.experimental.pallas import tpu as pltpu


def right_net_kernel(*refs, use_leftp, use_prior, two_class):
    """One batch tile in lane-dense (C, TB) layout."""
    if use_leftp and use_prior:
        x_ref, w_ref, leftp_ref, logprior_ref, out_ref = refs
    elif use_leftp:
        x_ref, w_ref, leftp_ref, out_ref = refs
        logprior_ref = None
    elif use_prior:
        x_ref, w_ref, logprior_ref, out_ref = refs
        leftp_ref = None
    else:
        x_ref, w_ref, out_ref = refs
        leftp_ref = logprior_ref = None

    # Fused expert contraction, batch on lanes:
    #   acc[c, b] = sum_k w[c, k] * x[k, b]  ==  (sum_i x[b, i, :] @ W_i^T)[c]
    acc = jnp.dot(w_ref[...], x_ref[...],
                  preferred_element_type=jnp.float32)          # (C, TB) f32

    if use_leftp:
        # EUP log, fully hidden under the x-tile DMA.  Kept in-kernel on
        # purpose (hoisting to the wrapper = extra un-hidden XLA pass).
        acc = acc + jnp.log(leftp_ref[...] + 0.001)            # (C, TB)
    if use_prior:
        acc = acc + logprior_ref[...]                          # (C, 1) bcast

    if two_class:
        # Softmax specialized for C == 2: no cross-sublane max/sum reduction,
        # one exp, one exact reciprocal (EUP + Newton), full-block store.
        d = acc[0:1, :] - acc[1:2, :]                          # (1, TB)
        p1 = pl.reciprocal(1.0 + jnp.exp(d), approx=False)
        p0 = 1.0 - p1
        out_ref[...] = jnp.concatenate([p0, p1], axis=0).astype(out_ref.dtype)
    else:
        m = jnp.max(acc, axis=0, keepdims=True)
        e = jnp.exp(acc - m)
        out_ref[...] = (e / jnp.sum(e, axis=0, keepdims=True)).astype(out_ref.dtype)


def right_neural_net_forward(x, w_stack, left_p, prior, ftype=0, *, tb_max=65536):
    """x: (B, M, C), w_stack: (M, C, C) PyTorch W[out,in], left_p: (B, C), prior: (C,)."""
    B, M, C = x.shape
    K = M * C
    ftype = int(ftype)
    use_leftp = ftype in (1, 3)
    use_prior = ftype in (1, 2)

    # --- lane-dense data prep (wrapper-side layout plumbing) -----------------
    # x_t[i*C + c, b] = x[b, i, c];  w_t[d, i*C + c] = W_i[d, c]
    x_t = jnp.transpose(x.astype(jnp.float32), (1, 2, 0)).reshape(K, B)   # (K, B)
    w_t = jnp.transpose(w_stack.astype(jnp.float32), (1, 0, 2)).reshape(C, K)  # (C, K)
    left_p_t = jnp.transpose(left_p.astype(jnp.float32))                  # (C, B)
    log_prior = jnp.log(prior.astype(jnp.float32)).reshape(C, 1)          # hoisted

    # --- batch tiling ---------------------------------------------------------
    # TB is a multiple of 128 (full 128-lane vst); >= 2 grid steps whenever
    # B > 128 so the "parallel" axis shards across both v7x TensorCores; TB
    # capped by tb_max rows (~2.5 MiB of x per step -> ~7 MiB double-buffered,
    # far under every generation's default scoped-VMEM limit, incl. v7x).
    q = max(1, -(-B // 128))                 # number of 128-row lane chunks
    min_tiles = 2 if q >= 2 else 1
    max_chunks = max(1, tb_max // 128)
    t0 = max(1, min(max_chunks, q // min_tiles))
    n_tiles = -(-q // t0)
    t = -(-q // n_tiles)                     # rebalance: padding < n_tiles*128 rows
    TB = t * 128
    Bp = n_tiles * TB

    if Bp != B:
        pad = Bp - B
        x_t = jnp.pad(x_t, ((0, 0), (0, pad)))                               # zeros
        left_p_t = jnp.pad(left_p_t, ((0, 0), (0, pad)), constant_values=1.0)  # finite log

    in_specs = [
        pl.BlockSpec((K, TB), lambda i: (0, i)),     # x tile (pipelined)
        pl.BlockSpec((C, K), lambda i: (0, 0)),      # fused weights (resident)
    ]
    args = [x_t, w_t]
    if use_leftp:
        in_specs.append(pl.BlockSpec((C, TB), lambda i: (0, i)))   # left_p tile
        args.append(left_p_t)
    if use_prior:
        in_specs.append(pl.BlockSpec((C, 1), lambda i: (0, 0)))    # log(prior) (resident)
        args.append(log_prior)

    kernel = functools.partial(right_net_kernel, use_leftp=use_leftp,
                               use_prior=use_prior, two_class=(C == 2))
    out_t = pl.pallas_call(
        kernel,
        out_shape=jax.ShapeDtypeStruct((C, Bp), jnp.float32),
        grid=(n_tiles,),
        in_specs=in_specs,
        out_specs=pl.BlockSpec((C, TB), lambda i: (0, i)),
        compiler_params=pltpu.CompilerParams(
            dimension_semantics=("parallel",)),
    )(*args)

    # Back to the PyTorch (B, C) layout; drop padded batch rows.
    return jnp.transpose(out_t)[:B]


def reference_forward(x, w_stack, left_p, prior, ftype=0):
    """Plain-JAX reference mirroring the PyTorch forward."""
    out = jnp.einsum("bmc,mdc->bd", x, w_stack)
    priority = prior.reshape(1, -1)          # ones(B,1) @ prior[:,None].T
    if ftype == 1:
        out = out + jnp.log(left_p + 0.001) + jnp.log(priority)
    elif ftype == 2:
        out = out + jnp.log(priority)
    elif ftype == 3:
        out = out + jnp.log(left_p + 0.001)
    return jax.nn.softmax(out, axis=1)


if __name__ == "__main__":
    # Dogs vs. Cats config: num_classes = 2.  B=200 exercises both the batch
    # padding path (Bp=256) and a 2-step grid (two 128-row lane tiles).
    B, EXPERT_NUM, NUM_CLASSES = 200, 4, 2

    key = jax.random.PRNGKey(0)
    k_tm, k_x, k_lp = jax.random.split(key, 3)

    # expert_tmatrix: per-expert row-stochastic confusion matrices.
    expert_tmatrix = jax.nn.softmax(
        jax.random.normal(k_tm, (EXPERT_NUM, NUM_CLASSES, NUM_CLASSES)), axis=-1)
    # weights_init(): W_i = log(expert_tmatrix_i + 1e-4)   (PyTorch W[out, in])
    w_stack = jnp.log(expert_tmatrix + 0.0001).astype(jnp.float32)

    # prior -> p.weight.data = prior.unsqueeze(1)
    prior = jnp.array([0.6, 0.4], dtype=jnp.float32)

    # x: per-expert class "probabilities"/labels (B, expert_num, num_classes)
    x = jax.nn.softmax(
        jax.random.normal(k_x, (B, EXPERT_NUM, NUM_CLASSES)), axis=-1
    ).astype(jnp.float32)
    # left_p: predictions of the left net (B, num_classes)
    left_p = jax.nn.softmax(
        jax.random.normal(k_lp, (B, NUM_CLASSES)), axis=-1
    ).astype(jnp.float32)

    ok = True
    for ftype in (0, 1, 2, 3):
        out = right_neural_net_forward(x, w_stack, left_p, prior, ftype=ftype)
        out = jax.block_until_ready(out)
        ref = reference_forward(x, w_stack, left_p, prior, ftype=ftype)
        if not jnp.allclose(out, ref, atol=1e-5, rtol=1e-5):
            ok = False
            err = float(jnp.max(jnp.abs(out - ref)))
            print(f"mismatch for type={ftype}: max abs err = {err}")

    if ok:
        print("KERNEL_OK")
</pallas_src>

<mosaic_0001>
module attributes {stable_mosaic.version = 11 : i64} {
  func.func @right_net_kernel(%arg0: i32, %arg1: memref<8x128xf32, #tpu.memory_space<vmem>>, %arg2: memref<2x8xf32, #tpu.memory_space<vmem>>, %arg3: memref<2x128xf32, #tpu.memory_space<vmem>>) attributes {dimension_semantics = [#tpu.dimension_semantics<parallel>], iteration_bounds = array<i64: 2>, scalar_prefetch = 0 : i64, scratch_operands = 0 : i64, tpu.core_type = #tpu.core_type<tc>, window_params = [{transform_indices = @transform_0, window_bounds = array<i64: 8, 128>}, {pipeline_mode = #tpu.pipeline_mode<synchronous>, transform_indices = @transform_1, window_bounds = array<i64: 2, 8>}, {transform_indices = @transform_2, window_bounds = array<i64: 2, 128>}]} {
    %c0 = arith.constant 0 : index
    %c0_0 = arith.constant 0 : index
    %0 = vector.load %arg2[%c0, %c0_0] : memref<2x8xf32, #tpu.memory_space<vmem>>, vector<2x8xf32>
    %c0_1 = arith.constant 0 : index
    %c0_2 = arith.constant 0 : index
    %1 = vector.load %arg1[%c0_1, %c0_2] : memref<8x128xf32, #tpu.memory_space<vmem>>, vector<8x128xf32>
    %cst = arith.constant dense<0.000000e+00> : vector<2x128xf32>
    %2 = tpu.matmul %0, %1, %cst {dimension_numbers = #tpu.dot_dimension_numbers<[1], [0], [0], [1], [0, 0, 1, 1], [], []>} : vector<2x8xf32>, vector<8x128xf32>, vector<2x128xf32> -> vector<2x128xf32>
    %3 = vector.extract_strided_slice %2 {offsets = [0, 0], sizes = [1, 128], strides = [1, 1]} : vector<2x128xf32> to vector<1x128xf32>
    %4 = vector.extract_strided_slice %2 {offsets = [1, 0], sizes = [1, 128], strides = [1, 1]} : vector<2x128xf32> to vector<1x128xf32>
    %5 = arith.subf %3, %4 : vector<1x128xf32>
    %6 = math.exp %5 : vector<1x128xf32>
    %cst_3 = arith.constant 1.000000e+00 : f32
    %7 = vector.broadcast %cst_3 : f32 to vector<1x128xf32>
    %8 = arith.addf %7, %6 : vector<1x128xf32>
    %9 = tpu.reciprocal %8 : vector<1x128xf32> -> vector<1x128xf32>
    %cst_4 = arith.constant 1.000000e+00 : f32
    %10 = vector.broadcast %cst_4 : f32 to vector<1x128xf32>
    %11 = arith.subf %10, %9 : vector<1x128xf32>
    %12 = tpu.concatenate %11, %9 in 0 : vector<1x128xf32>, vector<1x128xf32> -> vector<2x128xf32>
    %c0_5 = arith.constant 0 : index
    %c0_6 = arith.constant 0 : index
    %13 = vector.load %arg3[%c0_5, %c0_6] : memref<2x128xf32, #tpu.memory_space<vmem>>, vector<2x128xf32>
    tpu.vector_store %arg3[%c0_5, %c0_6], %12 {strides = array<i32>} : memref<2x128xf32, #tpu.memory_space<vmem>>, vector<2x128xf32>,
    return
  }
  func.func @transform_0(%arg0: i32) -> (i32, i32) {
    %c0_i32 = arith.constant 0 : i32
    %c0_i32_0 = arith.constant 0 : i32
    return %c0_i32, %arg0 : i32, i32
  }
  func.func @transform_1(%arg0: i32) -> (i32, i32) {
    %c0_i32 = arith.constant 0 : i32
    %c0_i32_0 = arith.constant 0 : i32
    %c0_i32_1 = arith.constant 0 : i32
    return %c0_i32, %c0_i32_0 : i32, i32
  }
  func.func @transform_2(%arg0: i32) -> (i32, i32) {
    %c0_i32 = arith.constant 0 : i32
    %c0_i32_0 = arith.constant 0 : i32
    return %c0_i32, %arg0 : i32, i32
  }
}

</mosaic_0001>

<llo_original>
// kernel: tpu_custom_call.1
$region0: #{tpu_custom_call.1}
  #allocation0 [shape = 'u32[]', space=smem, size = 0x4, offset = 0x4, fixed_abs, tag = 'smem constant byte address 0x4 - core index']
  #allocation1 [shape = 'u32[144,128]{1,0:T(1,128)}', space=vmem, size = 0x12000, scoped, tag = 'internal scratch']
  %s0 = inlined_call_operand.hbm [shape: f32[8,256], index: 0, kind: input, shape index: {}]
  %s1 = inlined_call_operand.vmem [shape: f32[2,8], index: 1, kind: input, shape index: {}]
  %s2 = inlined_call_operand.hbm [shape: f32[2,256], index: 2, kind: output, shape index: {}]
  %s3 = sld [smem:[#allocation0]]
  $region45: #{tpu_custom_call.1} parent=0
    _
  %s5 = ssub.s32 1, %s3
  %s6 = scalar_select 0, %s5, %s3
  $region1: #{tpu_custom_call.1} parent=0
    #allocation2 [shape = 'u8[8192]{0}', space=vmem, size = 0x2000, scoped, tag = 'input window, operand 0']
    #allocation3 [shape = 's32[2]{0}', space=sflag, size = 0x8, scoped, tag = 'scoped memory for tpu_custom_call.1']
    #allocation4 [shape = 's32[2]{0}', space=sflag, size = 0x8, scoped, tag = 'scoped memory for tpu_custom_call.1']
    #allocation5 [shape = 'u8[2048]{0}', space=vmem, size = 0x800, scoped, tag = 'output window, operand 0']
    %7 = vsyncpa [#allocation3], 0
    %s8 = scalar_lea.sflag [#allocation3], 1
    %9 = vsyncpa %s8, 0
    %10 = vsyncpa [#allocation4], 0
    %s11 = scalar_lea.sflag [#allocation4], 1
    %12 = vsyncpa %s11, 0
    loop: start=0, step=1, limit=4
    $region2: #{tpu_custom_call.1} parent=1 // loop_pre_header
      _
    $region3: #{tpu_custom_call.1} parent=1 // loop_header
      %s14 = sphi 0, %s18
      %p15 = scmp.ge.s32.totalorder %s14, 4
      %s24 = sphi 0, %s26
      %s27 = sphi 0, %s24
      %s28 = sphi 0, %s27
      %s44 = sphi 0, %s28
      %s48 = sphi 0, %s48
      %s50 = sphi 0, %s48
      %s51 = sphi 0, %s50
      %s65 = sphi 0, %s51
      %s71 = sphi 0, %s73
      %s74 = sphi 0, %s71
      %s75 = sphi 0, %s74
      %s91 = sphi 0, %s75
    $region4: #{tpu_custom_call.1} parent=1 // loop_header_branch
      %17 = sbr.rel (%p15) target = $region8
    $region5: #{tpu_custom_call.1} parent=1 // loop_body
      %s19 = ssub.s32 %s14, 1
      %s20 = ssub.s32 %s14, 2
      %s21 = sadd.s32 %s14, 1
      %s22 = ssub.s32 %s14, %s21
      %p23 = scmp.eq.s32.totalorder %s22, 0
      %s25 = sadd.s32 %s24, 1
      %s26 = scalar_select %p23, %s24, %s25
      %p29 = pneg %p23
      %p30 = scmp.eq.s32.totalorder %s14, 1
      %p31 = por %p29, %p30
      %p32 = scmp.ne.s32.totalorder %s24, %s27
      %p33 = scmp.eq.s32.totalorder %s14, 0
      %p34 = por %p32, %p33
      %p35 = scmp.ne.s32.totalorder %s24, %s27
      %p36 = scmp.eq.s32.totalorder %s19, 1
      %p37 = por %p35, %p36
      %p38 = scmp.ne.s32.totalorder %s27, %s28
      %p39 = scmp.eq.s32.totalorder %s19, 0
      %p40 = por %p38, %p39
      %p41 = scmp.ne.s32.totalorder %s27, %s28
      %p42 = scmp.eq.s32.totalorder %s20, 1
      %p43 = por %p41, %p42
      %p45 = scmp.ne.s32.totalorder %s28, %s44
      %p46 = scmp.eq.s32.totalorder %s20, 0
      %p47 = por %p45, %p46
      %s49 = sadd.s32 %s48, 1
      %p52 = scmp.eq.s32.totalorder %s14, 1
      %p53 = scmp.ne.s32.totalorder %s48, %s50
      %p54 = scmp.eq.s32.totalorder %s14, 0
      %p55 = por %p53, %p54
      %p56 = scmp.ne.s32.totalorder %s48, %s50
      %p57 = scmp.eq.s32.totalorder %s19, 1
      %p58 = por %p56, %p57
      %p59 = scmp.ne.s32.totalorder %s50, %s51
      %p60 = scmp.eq.s32.totalorder %s19, 0
      %p61 = por %p59, %p60
      %p62 = scmp.ne.s32.totalorder %s50, %s51
      %p63 = scmp.eq.s32.totalorder %s20, 1
      %p64 = por %p62, %p63
      %p66 = scmp.ne.s32.totalorder %s51, %s65
      %p67 = scmp.eq.s32.totalorder %s20, 0
      %p68 = por %p66, %p67
      %s69 = ssub.s32 %s14, %s21
      %p70 = scmp.eq.s32.totalorder %s69, 0
      %s72 = sadd.s32 %s71, 1
      %s73 = scalar_select %p70, %s71, %s72
      %p76 = pneg %p70
      %p77 = scmp.eq.s32.totalorder %s14, 1
      %p78 = por %p76, %p77
      %p79 = scmp.ne.s32.totalorder %s71, %s74
      %p80 = scmp.eq.s32.totalorder %s14, 0
      %p81 = por %p79, %p80
      %p82 = scmp.ne.s32.totalorder %s71, %s74
      %p83 = scmp.eq.s32.totalorder %s19, 1
      %p84 = por %p82, %p83
      %p85 = scmp.ne.s32.totalorder %s74, %s75
      %p86 = scmp.eq.s32.totalorder %s19, 0
      %p87 = por %p85, %p86
      %p88 = scmp.ne.s32.totalorder %s74, %s75
      %p89 = scmp.eq.s32.totalorder %s20, 1
      %p90 = por %p88, %p89
      %p92 = scmp.ne.s32.totalorder %s75, %s91
      %p93 = scmp.eq.s32.totalorder %s20, 0
      %p94 = por %p92, %p93
      %p95 = scmp.le.s32.totalorder 1, %s14
      %p96 = scmp.lt.s32.totalorder %s14, 3
      %p97 = pnand %p95, %p96
      %p98 = pneg %p97
      // Predicated region
      $region9: #{tpu_custom_call.1} parent=5 // pred_check
        _
      $region10: #{tpu_custom_call.1} parent=5 // pred_check_branch
        %100 = sbr.rel (%p97) target = $region12
      $region11: #{tpu_custom_call.1} parent=5 // pred_region
        %s101 = ssub.s32 %s14, 1
        // Predicated region
        $region13: #{tpu_custom_call.1} parent=11 // pred_check
          %p102 = pneg %p61
        $region14: #{tpu_custom_call.1} parent=11 // pred_check_branch
          %104 = sbr.rel (%p102) target = $region16
        $region15: #{tpu_custom_call.1} parent=11 // pred_region
          _
        $region16: #{tpu_custom_call.1} parent=11 // pred_fallthru
          _
      $region12: #{tpu_custom_call.1} parent=5 // pred_fallthru
        _
      %p105 = scmp.lt.s32.totalorder %s14, 2
      // Predicated region
      $region17: #{tpu_custom_call.1} parent=5 // pred_check
        %p106 = pneg %p105
      $region18: #{tpu_custom_call.1} parent=5 // pred_check_branch
        %108 = sbr.rel (%p106) target = $region20
      $region19: #{tpu_custom_call.1} parent=5 // pred_region
        // Predicated region
        $region21: #{tpu_custom_call.1} parent=19 // pred_check
          %p109 = pneg %p34
        $region22: #{tpu_custom_call.1} parent=19 // pred_check_branch
          %111 = sbr.rel (%p109) target = $region24
        $region23: #{tpu_custom_call.1} parent=19 // pred_region
          %s112 = sand.u32 %s24, 1
          %s113 = scalar_lea.sflag [#allocation3], %s112
          %s114 = sand.u32 %s24, 1
          %s115 = smul.addr %s114, 8
          %s116 = scalar_lea.vmem [#allocation2], %s115
          %s118 = ssub.s32 128, 128
          %119 = vsyncadd %s113, %s118
          %s120 = smul.addr %s14, 128
          %s121 = scalar_lea.hbm %s0, %s120
          %s123 = sshll.u32 %s116, 4
          %s124 = int_to_ptr.vmem [resolvable:$true] %s123
          %126 = dma.hbm_to_vmem [thread:$0]  %s121, 128, %s124, %s113
        $region24: #{tpu_custom_call.1} parent=19 // pred_fallthru
          _
      $region20: #{tpu_custom_call.1} parent=5 // pred_fallthru
        _
      %p127 = scmp.le.s32.totalorder 1, %s14
      %p128 = scmp.lt.s32.totalorder %s14, 3
      %p129 = pnand %p127, %p128
      %p130 = pneg %p129
      // Predicated region
      $region25: #{tpu_custom_call.1} parent=5 // pred_check
        _
      $region26: #{tpu_custom_call.1} parent=5 // pred_check_branch
        %132 = sbr.rel (%p129) target = $region28
      $region27: #{tpu_custom_call.1} parent=5 // pred_region
        %s133 = ssub.s32 %s14, 1
        %s134 = sand.u32 %s27, 1
        %s135 = scalar_lea.sflag [#allocation3], %s134
        %s136 = sand.u32 %s27, 1
        %s137 = smul.addr %s136, 8
        %s138 = scalar_lea.vmem [#allocation2], %s137
        // Predicated region
        $region29: #{tpu_custom_call.1} parent=27 // pred_check
          %p139 = pneg %p40
        $region30: #{tpu_custom_call.1} parent=27 // pred_check_branch
          %141 = sbr.rel (%p139) target = $region32
        $region31: #{tpu_custom_call.1} parent=27 // pred_region
          %142 = dma.done %s135, 128
        $region32: #{tpu_custom_call.1} parent=27 // pred_fallthru
          _
        %s143 = sand.u32 %s27, 1
        %s144 = scalar_lea.sflag [#allocation3], %s143
        %s145 = sand.u32 %s27, 1
        %s146 = smul.addr %s145, 8
        %s147 = scalar_lea.vmem [#allocation2], %s146
        %p148 = pneg %p40
        %p149 = pneg %p37
        %p150 = pneg %p61
        %p151 = pneg %p58
        %p152 = pneg %p87
        %p153 = pneg %p84
        %s154 = sand.u32 %s74, 1
        %s155 = scalar_lea.sflag [#allocation4], %s154
        %s156 = sand.u32 %s74, 1
        %s157 = smul.addr %s156, 2
        %s158 = scalar_lea.vmem [#allocation5], %s157
        %v159 = vld [vmem:[%s1] sm:$0x3]
        %v160 = vld [vmem:[%s138] sm:$0xff]
        %vm161 = vcmask 64512
        %v163 = vsel %vm161, %v159, 0
        %165 = vmatprep.subr.mxu0 0.0
        %166 = vmatpush1.msra.mxu0 %v160
        %167 = vmatprep.subr.mxu0 0.0
        %168 = vmatpush1.msra.mxu0 0.0
        %169 = vmatprep.subr.mxu0 0.0
        %170 = vmatpush1.msra.mxu0 0.0
        %171 = vmatprep.subr.mxu0 0.0
        %172 = vmatpush1.msra.mxu0 0.0
        %173 = vmatprep.subr.mxu0 0.0
        %174 = vmatpush1.msra.mxu0 0.0
        %175 = vmatprep.subr.mxu0 0.0
        %176 = vmatpush1.msra.mxu0 0.0
        %177 = vmatprep.subr.mxu0 0.0
        %178 = vmatpush1.msra.mxu0 0.0
        %179 = vmatprep.subr.mxu0 0.0
        %180 = vmatpush1.msra.mxu0 0.0
        %181 = vmatprep.subr.mxu0 0.0
        %182 = vmatpush1.msra.mxu0 0.0
        %183 = vmatprep.subr.mxu0 0.0
        %184 = vmatpush1.msra.mxu0 0.0
        %185 = vmatprep.subr.mxu0 0.0
        %186 = vmatpush1.msra.mxu0 0.0
        %187 = vmatprep.subr.mxu0 0.0
        %188 = vmatpush1.msra.mxu0 0.0
        %189 = vmatprep.subr.mxu0 0.0
        %190 = vmatpush1.msra.mxu0 0.0
        %191 = vmatprep.subr.mxu0 0.0
        %192 = vmatpush1.msra.mxu0 0.0
        %193 = vmatprep.subr.mxu0 0.0
        %194 = vmatpush1.msra.mxu0 0.0
        %195 = vmatprep.subr.mxu0 0.0
        %196 = vmatpush1.msra.mxu0 0.0
        %197 = vmatprep.subr.mxu0 0.0
        %198 = vmatpush1.msra.mxu0 0.0
        %199 = vmatprep.subr.mxu0 0.0
        %200 = vmatpush1.msra.mxu0 0.0
        %201 = vmatprep.subr.mxu0 0.0
        %202 = vmatpush1.msra.mxu0 0.0
        %203 = vmatprep.subr.mxu0 0.0
        %204 = vmatpush1.msra.mxu0 0.0
        %205 = vmatprep.subr.mxu0 0.0
        %206 = vmatpush1.msra.mxu0 0.0
        %207 = vmatprep.subr.mxu0 0.0
        %208 = vmatpush1.msra.mxu0 0.0
        %209 = vmatprep.subr.mxu0 0.0
        %210 = vmatpush1.msra.mxu0 0.0
        %211 = vmatprep.subr.mxu0 0.0
        %212 = vmatpush1.msra.mxu0 0.0
        %213 = vmatprep.subr.mxu0 0.0
        %214 = vmatpush1.msra.mxu0 0.0
        %215 = vmatprep.subr.mxu0 0.0
        %216 = vmatpush1.msra.mxu0 0.0
        %217 = vmatprep.subr.mxu0 0.0
        %218 = vmatpush1.msra.mxu0 0.0
        %219 = vmatprep.subr.mxu0 0.0
        %220 = vmatpush1.msra.mxu0 0.0
        %221 = vmatprep.subr.mxu0 0.0
        %222 = vmatpush1.msra.mxu0 0.0
        %223 = vmatprep.subr.mxu0 0.0
        %224 = vmatpush1.msra.mxu0 0.0
        %225 = vmatprep.subr.mxu0 0.0
        %226 = vmatpush1.msra.mxu0 0.0
        %227 = vmatprep.subr.mxu0 0.0
        %228 = vmatpush1.msra.mxu0 0.0
        %229 = vmatprep.mubr.f32.mxu0 0.0
        %230 = vmatmul.mubr.f32.gmra.mrb[0].mxu0 %v163
        %v231 = vpop.f32.mrb[0].mxu0
        %v232 = vadd.f32 0.0, %v231
        %v233 = vpop.f32.mrb[0].mxu0
        %234 = vdwg.mxu0
        %v236 = vrot.slane %v232, 1
        %v238 = vsub.f32 %v232, %v236
        %v239 = vmul.f32 %v238, 1.442695
        %v240 = vpow.pop %v239
        %v241 = vadd.f32 %v240, 1.0
        %v242 = vrcp.pop %v241
        %v243 = vsub.f32 1.0, %v242
        %v245 = vrot.slane %v242, 7
        %vm247 = vcmask 1040384
        %v248 = vsel %vm247, %v243, %v245
        %249 = vst [vmem:[%s158] sm:$0x3] %v248
        %s250 = sand.u32 %s74, 1
        %s251 = scalar_lea.sflag [#allocation4], %s250
        %s252 = sand.u32 %s74, 1
        %s253 = smul.addr %s252, 2
        %s254 = scalar_lea.vmem [#allocation5], %s253
        // Predicated region
        $region33: #{tpu_custom_call.1} parent=27 // pred_check
          %p255 = pneg %p84
        $region34: #{tpu_custom_call.1} parent=27 // pred_check_branch
          %257 = sbr.rel (%p255) target = $region36
        $region35: #{tpu_custom_call.1} parent=27 // pred_region
          %s259 = ssub.s32 32, 32
          %260 = vsyncadd %s251, %s259
          %s261 = smul.addr %s19, 32
          %s262 = scalar_lea.hbm %s2, %s261
          %s264 = sshll.u32 %s254, 4
          %s265 = int_to_ptr.vmem [resolvable:$true] %s264
          %267 = dma.vmem_to_hbm [thread:$0]  %s265, 32, %s262, %s251
        $region36: #{tpu_custom_call.1} parent=27 // pred_fallthru
          _
      $region28: #{tpu_custom_call.1} parent=5 // pred_fallthru
        _
      %p268 = scmp.le.s32.totalorder 2, %s14
      // Predicated region
      $region37: #{tpu_custom_call.1} parent=5 // pred_check
        %p269 = pneg %p268
      $region38: #{tpu_custom_call.1} parent=5 // pred_check_branch
        %271 = sbr.rel (%p269) target = $region40
      $region39: #{tpu_custom_call.1} parent=5 // pred_region
        %s272 = ssub.s32 %s14, 2
        // Predicated region
        $region41: #{tpu_custom_call.1} parent=39 // pred_check
          %p273 = pneg %p90
        $region42: #{tpu_custom_call.1} parent=39 // pred_check_branch
          %275 = sbr.rel (%p273) target = $region44
        $region43: #{tpu_custom_call.1} parent=39 // pred_region
          %s276 = sand.u32 %s75, 1
          %s277 = scalar_lea.sflag [#allocation4], %s276
          %s278 = sand.u32 %s75, 1
          %s279 = smul.addr %s278, 2
          %s280 = scalar_lea.vmem [#allocation5], %s279
          %281 = dma.done %s277, 32
        $region44: #{tpu_custom_call.1} parent=39 // pred_fallthru
          _
      $region40: #{tpu_custom_call.1} parent=5 // pred_fallthru
        _
    $region6: #{tpu_custom_call.1} parent=1 // loop_footer
      %s18 = sadd.s32 1, %s14
    $region7: #{tpu_custom_call.1} parent=1 // loop_footer_branch
      %13 = sbr.rel target = $region3
    $region8: #{tpu_custom_call.1} parent=1 // loop_exit
      _
    %282 = vsyncpa [#allocation3], 1
    %s283 = scalar_lea.sflag [#allocation3], 1
    %284 = vsyncpa %s283, 1
    %285 = vsyncpa [#allocation4], 1
    %s286 = scalar_lea.sflag [#allocation4], 1
    %287 = vsyncpa %s286, 1

</llo_original>
